<compile_context>
chip_gen: v7x
topology: tpu7x:2x2x1
jax: 0.10.0
libtpu: 0.0.40
codegen_flags: <defaults>
</compile_context>

<pallas_src>
import functools

import jax
import jax.numpy as jnp
from jax.experimental import pallas as pl
from jax.experimental.pallas import tpu as pltpu


# ----------------------------------------------------------------------------
# Kernel: one batch element per grid step.
# ----------------------------------------------------------------------------
def _spatial_decoder_kernel(xin_ref, pp_ref, w_in_ref, w_o1_ref, w_ro_ref,
                            bias_ref, out_ref, *, N, H, Fout, OUT_W, dtype):
    f32 = jnp.float32
    xin = xin_ref[...]                         # [N, CIN]  lanes = [h | x | mask | 0-pad]
    bias = bias_ref[...]                       # [4, BW]   rows = [b_in, b_out', b_ro, alpha]
    hf = xin[:, :H]                            # [N, H]    hidden state (offset-0 lane slice)

    # lin_in(cat([x, mask, h], -1)) -- weight rows reordered to [h|x|mask].
    z = (jnp.dot(xin.astype(dtype), w_in_ref[...].astype(dtype),
                 preferred_element_type=f32) + bias[0:1, :H])            # [N, H]

    # Graph diffusion: both directions in one dot with stacked supports
    # [P_fwd ; P_bwd]  ([2N, N] @ [N, H] -> [2N, H]).
    zfzb = jnp.dot(pp_ref[...].astype(dtype), z.astype(dtype),
                   preferred_element_type=f32)                           # [2N, H]
    gcat = jnp.concatenate([zfzb[:N, :], zfzb[N:, :]], axis=1)           # [N, 2H]

    # PReLU(lin_out(cat([graph_conv(z), h], -1))) with DiffConv.filters folded
    # into lin_out: o1 = [zf|zb|h] @ [W_g^T @ W_out_top ; W_out_bot] + b_out'.
    o1 = (jnp.dot(jnp.concatenate([gcat, hf], axis=1).astype(dtype),
                  w_o1_ref[...].astype(dtype),
                  preferred_element_type=f32) + bias[1:2, :H])           # [N, H]
    alpha = bias[3:4, 0:1]                                               # [1, 1]
    act = jnp.where(o1 >= 0, o1, alpha * o1)

    # read_out(cat([act, h], -1)); the concat doubles as the output head.
    cat_ah = jnp.concatenate([act, hf], axis=1)                          # [N, 2H]
    y = (jnp.dot(cat_ah.astype(dtype), w_ro_ref[...].astype(dtype),
                 preferred_element_type=f32) + bias[2:3, :Fout])         # [N, Fout]

    parts = [cat_ah, y]
    if OUT_W > 2 * H + Fout:
        parts.append(jnp.zeros((N, OUT_W - 2 * H - Fout), f32))
    out_ref[...] = jnp.concatenate(parts, axis=1)                        # [N, OUT_W]


# ----------------------------------------------------------------------------
# Dense diffusion supports: remove_self_loops + asymmetric norm (fwd + bwd).
# ----------------------------------------------------------------------------
def _build_supports(edge_index, edge_weight, num_nodes):
    src, tgt = edge_index[0], edge_index[1]
    keep = (src != tgt).astype(jnp.float32)
    w = edge_weight * keep
    a = jnp.zeros((num_nodes, num_nodes), jnp.float32).at[src, tgt].add(w)
    deg_in = a.sum(axis=0)
    deg_out = a.sum(axis=1)
    inv_in = jnp.where(deg_in > 0, 1.0 / deg_in, 0.0)
    inv_out = jnp.where(deg_out > 0, 1.0 / deg_out, 0.0)
    p_fwd = a.T * inv_in[:, None]     # out[i] = sum_j A[j,i]/deg_in(i)  * x[j]
    p_bwd = a * inv_out[:, None]      # out[i] = sum_j A[i,j]/deg_out(i) * x[j]
    return p_fwd, p_bwd


# ----------------------------------------------------------------------------
# Wrapper: pack operands, one pallas_call with grid=(B,), unpack outputs.
# ----------------------------------------------------------------------------
@functools.partial(jax.jit, static_argnames=("matmul_dtype",))
def spatial_decoder_forward(x, mask, h, edge_index, edge_weight, params,
                            matmul_dtype=jnp.float32):
    B, N, F = x.shape
    H = h.shape[-1]
    Fout = params["W_ro"].shape[0]
    cin = 2 * F + H
    CIN = ((cin + 7) // 8) * 8                    # K of lin_in, padded to %8 only
    BW = max(H, Fout)                             # bias tile width
    OUT_W = ((2 * H + Fout + 127) // 128) * 128   # lane-dense output slab width

    # Graph supports shared by the whole batch.
    p_fwd, p_bwd = _build_supports(edge_index, edge_weight, N)
    pp = jnp.concatenate([p_fwd, p_bwd], axis=0).astype(matmul_dtype)   # [2N, N]

    # lin_in weight: rows reordered [h | x | mask], zero-padded to CIN rows.
    w_in_t = params["W_in"].T.astype(jnp.float32)                       # rows = [x|mask|h]
    w_in_r = jnp.concatenate([w_in_t[2 * F:], w_in_t[:2 * F]], axis=0)  # rows = [h|x|mask]
    w_in = jnp.pad(w_in_r, ((0, CIN - cin), (0, 0))).astype(matmul_dtype)

    # Fold DiffConv.filters into lin_out (linear chain, no nonlinearity).
    w_out_t = params["W_out"].T.astype(jnp.float32)                     # [2H, H]
    w_out_top, w_out_bot = w_out_t[:H], w_out_t[H:]
    w_o1 = jnp.concatenate(
        [params["W_g"].T.astype(jnp.float32) @ w_out_top, w_out_bot],
        axis=0).astype(matmul_dtype)                                    # [3H, H]
    b_o1 = params["b_g"] @ w_out_top + params["b_out"]                  # [H]

    w_ro = params["W_ro"].T.astype(matmul_dtype)                        # [2H, Fout]

    # Bias tile [4, BW]: b_in, b_out' (folded), b_ro, prelu-alpha@[3,0].
    bias = jnp.zeros((4, BW), jnp.float32)
    bias = bias.at[0, :H].set(params["b_in"])
    bias = bias.at[1, :H].set(b_o1)
    bias = bias.at[2, :Fout].set(params["b_ro"])
    bias = bias.at[3, 0].set(params["prelu"][0])

    # Activations: [h | x | mask], zero-padded to CIN lanes (stay f32 so the
    # h copy in the output slab is exact).
    xin = jnp.concatenate([h, x, mask], axis=-1)
    xin = jnp.pad(xin, ((0, 0), (0, 0), (0, CIN - cin))).astype(jnp.float32)

    # VMEM budget: resident weights/supports + double-buffered per-step blocks
    # + headroom; clamped so it is valid on v5e/v6e (128 MiB) and v7x (64 MiB).
    f32b = 4
    resident = f32b * (2 * N * N + CIN * H + 3 * H * H + 2 * H * Fout + 4 * BW)
    stream = f32b * 2 * (N * CIN + N * OUT_W)
    vmem_limit_bytes = int(min(max(4 * (resident + stream) + (2 << 20), 8 << 20),
                               48 << 20))

    flops = B * 2 * (N * CIN * H + 2 * N * N * H + N * 3 * H * H
                     + N * 2 * H * Fout)
    bytes_accessed = f32b * (B * N * CIN + 2 * N * N + CIN * H + 3 * H * H
                             + 2 * H * Fout + 4 * BW + B * N * OUT_W)

    kernel = functools.partial(_spatial_decoder_kernel, N=N, H=H, Fout=Fout,
                               OUT_W=OUT_W, dtype=matmul_dtype)

    slab = pl.pallas_call(
        kernel,
        out_shape=jax.ShapeDtypeStruct((B, N, OUT_W), jnp.float32),
        grid=(B,),
        in_specs=[
            pl.BlockSpec((None, N, CIN), lambda b: (b, 0, 0)),   # xin (per-batch)
            pl.BlockSpec((2 * N, N), lambda b: (0, 0)),          # supports (resident)
            pl.BlockSpec((CIN, H), lambda b: (0, 0)),            # lin_in weight
            pl.BlockSpec((3 * H, H), lambda b: (0, 0)),          # filters+lin_out fused
            pl.BlockSpec((2 * H, Fout), lambda b: (0, 0)),       # read_out weight
            pl.BlockSpec((4, BW), lambda b: (0, 0)),             # biases + prelu alpha
        ],
        out_specs=pl.BlockSpec((None, N, OUT_W), lambda b: (b, 0, 0)),
        compiler_params=pltpu.CompilerParams(
            dimension_semantics=("parallel",),
            vmem_limit_bytes=vmem_limit_bytes),
        cost_estimate=pl.CostEstimate(
            flops=int(flops), transcendentals=0,
            bytes_accessed=int(bytes_accessed)),
    )(xin, pp, w_in, w_o1, w_ro, bias)

    out_cat = slab[..., :2 * H]            # cat([act, h], -1)  (second output)
    y = slab[..., 2 * H:2 * H + Fout]      # read_out(...)      (first output)
    return y, out_cat


# ----------------------------------------------------------------------------
# Pure-JAX reference (mirrors the PyTorch forward with dense supports).
# ----------------------------------------------------------------------------
def reference_forward(x, mask, h, edge_index, edge_weight, params):
    p_fwd, p_bwd = _build_supports(edge_index, edge_weight, x.shape[1])
    xin = jnp.concatenate([x, mask, h], -1)
    z = xin @ params["W_in"].T + params["b_in"]
    zf = jnp.einsum("ij,bjh->bih", p_fwd, z)
    zb = jnp.einsum("ij,bjh->bih", p_bwd, z)
    g = jnp.concatenate([zf, zb], -1) @ params["W_g"].T + params["b_g"]
    o1 = jnp.concatenate([g, h], -1) @ params["W_out"].T + params["b_out"]
    a = params["prelu"][0]
    act = jnp.where(o1 >= 0, o1, a * o1)
    cat = jnp.concatenate([act, h], -1)
    y = cat @ params["W_ro"].T + params["b_ro"]
    return y, cat


# ----------------------------------------------------------------------------
# Main
# ----------------------------------------------------------------------------
if __name__ == "__main__":
    B, N = 2, 16          # batch, nodes
    F = 4                 # input_size
    H = 32                # hidden_size
    Fout = F              # output_size defaults to input_size
    # exog_size = 0, order = 1, u = None

    key = jax.random.PRNGKey(0)
    keys = jax.random.split(key, 16)

    def init(k, shape, scale=0.1):
        return scale * jax.random.normal(k, shape, dtype=jnp.float32)

    params = {
        "W_in": init(keys[0], (H, 2 * F + H)),
        "b_in": init(keys[1], (H,)),
        "W_g": init(keys[2], (H, 2 * H)),     # DiffConv.filters (2 supports, k=1)
        "b_g": init(keys[3], (H,)),
        "W_out": init(keys[4], (H, 2 * H)),
        "b_out": init(keys[5], (H,)),
        "W_ro": init(keys[6], (Fout, 2 * H)),
        "b_ro": init(keys[7], (Fout,)),
        "prelu": jnp.array([0.25], dtype=jnp.float32),  # nn.PReLU default init
    }

    x = jax.random.normal(keys[8], (B, N, F), dtype=jnp.float32)
    mask = (jax.random.uniform(keys[9], (B, N, F)) > 0.3).astype(jnp.float32)
    h = jax.random.normal(keys[10], (B, N, H), dtype=jnp.float32)

    # Small directed graph: ring edges i->i+1, i->i+2, plus one self loop
    # (self loops are removed by the forward pass).
    nodes = jnp.arange(N, dtype=jnp.int32)
    src = jnp.concatenate([nodes, nodes, jnp.array([0], jnp.int32)])
    tgt = jnp.concatenate([(nodes + 1) % N, (nodes + 2) % N,
                           jnp.array([0], jnp.int32)])
    edge_index = jnp.stack([src, tgt], axis=0)
    edge_weight = jax.random.uniform(
        keys[11], (edge_index.shape[1],), minval=0.5, maxval=1.5
    ).astype(jnp.float32)

    y, out_cat = spatial_decoder_forward(x, mask, h, edge_index, edge_weight,
                                         params)
    jax.block_until_ready((y, out_cat))

    y_ref, out_ref = reference_forward(x, mask, h, edge_index, edge_weight,
                                       params)
    assert y.shape == (B, N, Fout) and out_cat.shape == (B, N, 2 * H)
    assert jnp.allclose(y, y_ref, rtol=1e-3, atol=1e-3)
    assert jnp.allclose(out_cat, out_ref, rtol=1e-3, atol=1e-3)

    print("KERNEL_OK")
</pallas_src>

<mosaic_0001>
module attributes {stable_mosaic.version = 11 : i64} {
  func.func @_spatial_decoder_kernel(%arg0: i32, %arg1: memref<1x16x40xf32, #tpu.memory_space<vmem>>, %arg2: memref<32x16xf32, #tpu.memory_space<vmem>>, %arg3: memref<40x32xf32, #tpu.memory_space<vmem>>, %arg4: memref<96x32xf32, #tpu.memory_space<vmem>>, %arg5: memref<64x4xf32, #tpu.memory_space<vmem>>, %arg6: memref<4x32xf32, #tpu.memory_space<vmem>>, %arg7: memref<1x16x128xf32, #tpu.memory_space<vmem>>) attributes {dimension_semantics = [#tpu.dimension_semantics<parallel>], iteration_bounds = array<i64: 2>, scalar_prefetch = 0 : i64, scratch_operands = 0 : i64, tpu.core_type = #tpu.core_type<tc>, window_params = [{transform_indices = @transform_0, window_bounds = array<i64: 1, 16, 40>}, {pipeline_mode = #tpu.pipeline_mode<synchronous>, transform_indices = @transform_1, window_bounds = array<i64: 32, 16>}, {pipeline_mode = #tpu.pipeline_mode<synchronous>, transform_indices = @transform_2, window_bounds = array<i64: 40, 32>}, {pipeline_mode = #tpu.pipeline_mode<synchronous>, transform_indices = @transform_3, window_bounds = array<i64: 96, 32>}, {pipeline_mode = #tpu.pipeline_mode<synchronous>, transform_indices = @transform_4, window_bounds = array<i64: 64, 4>}, {pipeline_mode = #tpu.pipeline_mode<synchronous>, transform_indices = @transform_5, window_bounds = array<i64: 4, 32>}, {transform_indices = @transform_6, window_bounds = array<i64: 1, 16, 128>}]} {
    %c0 = arith.constant 0 : index
    %c0_0 = arith.constant 0 : index
    %c0_1 = arith.constant 0 : index
    %0 = vector.load %arg1[%c0, %c0_0, %c0_1] : memref<1x16x40xf32, #tpu.memory_space<vmem>>, vector<1x16x40xf32>
    %1 = vector.shape_cast %0 : vector<1x16x40xf32> to vector<16x40xf32>
    %c0_2 = arith.constant 0 : index
    %c0_3 = arith.constant 0 : index
    %2 = vector.load %arg6[%c0_2, %c0_3] : memref<4x32xf32, #tpu.memory_space<vmem>>, vector<4x32xf32>
    %3 = vector.extract_strided_slice %1 {offsets = [0, 0], sizes = [16, 32], strides = [1, 1]} : vector<16x40xf32> to vector<16x32xf32>
    %c0_4 = arith.constant 0 : index
    %c0_5 = arith.constant 0 : index
    %4 = vector.load %arg3[%c0_4, %c0_5] : memref<40x32xf32, #tpu.memory_space<vmem>>, vector<40x32xf32>
    %cst = arith.constant dense<0.000000e+00> : vector<16x32xf32>
    %5 = tpu.matmul %1, %4, %cst {dimension_numbers = #tpu.dot_dimension_numbers<[1], [0], [0], [1], [0, 0, 1, 1], [], []>} : vector<16x40xf32>, vector<40x32xf32>, vector<16x32xf32> -> vector<16x32xf32>
    %6 = vector.extract_strided_slice %2 {offsets = [0, 0], sizes = [1, 32], strides = [1, 1]} : vector<4x32xf32> to vector<1x32xf32>
    %7 = vector.broadcast %6 : vector<1x32xf32> to vector<16x32xf32>
    %8 = arith.addf %5, %7 : vector<16x32xf32>
    %c0_6 = arith.constant 0 : index
    %c0_7 = arith.constant 0 : index
    %9 = vector.load %arg2[%c0_6, %c0_7] : memref<32x16xf32, #tpu.memory_space<vmem>>, vector<32x16xf32>
    %cst_8 = arith.constant dense<0.000000e+00> : vector<32x32xf32>
    %10 = tpu.matmul %9, %8, %cst_8 {dimension_numbers = #tpu.dot_dimension_numbers<[1], [0], [0], [1], [0, 0, 1, 1], [], []>} : vector<32x16xf32>, vector<16x32xf32>, vector<32x32xf32> -> vector<32x32xf32>
    %11 = vector.extract_strided_slice %10 {offsets = [0, 0], sizes = [16, 32], strides = [1, 1]} : vector<32x32xf32> to vector<16x32xf32>
    %12 = vector.extract_strided_slice %10 {offsets = [16, 0], sizes = [16, 32], strides = [1, 1]} : vector<32x32xf32> to vector<16x32xf32>
    %13 = tpu.concatenate %11, %12 in 1 : vector<16x32xf32>, vector<16x32xf32> -> vector<16x64xf32>
    %14 = tpu.concatenate %13, %3 in 1 : vector<16x64xf32>, vector<16x32xf32> -> vector<16x96xf32>
    %c0_9 = arith.constant 0 : index
    %c0_10 = arith.constant 0 : index
    %15 = vector.load %arg4[%c0_9, %c0_10] : memref<96x32xf32, #tpu.memory_space<vmem>>, vector<96x32xf32>
    %cst_11 = arith.constant dense<0.000000e+00> : vector<16x32xf32>
    %16 = tpu.matmul %14, %15, %cst_11 {dimension_numbers = #tpu.dot_dimension_numbers<[1], [0], [0], [1], [0, 0, 1, 1], [], []>} : vector<16x96xf32>, vector<96x32xf32>, vector<16x32xf32> -> vector<16x32xf32>
    %17 = vector.extract_strided_slice %2 {offsets = [1, 0], sizes = [1, 32], strides = [1, 1]} : vector<4x32xf32> to vector<1x32xf32>
    %18 = vector.broadcast %17 : vector<1x32xf32> to vector<16x32xf32>
    %19 = arith.addf %16, %18 : vector<16x32xf32>
    %20 = vector.extract_strided_slice %2 {offsets = [3, 0], sizes = [1, 1], strides = [1, 1]} : vector<4x32xf32> to vector<1x1xf32>
    %cst_12 = arith.constant 0.000000e+00 : f32
    %21 = vector.broadcast %cst_12 : f32 to vector<16x32xf32>
    %22 = arith.cmpf oge, %19, %21 : vector<16x32xf32>
    %23 = vector.broadcast %20 : vector<1x1xf32> to vector<16x32xf32>
    %24 = arith.mulf %23, %19 : vector<16x32xf32>
    %25 = arith.select %22, %19, %24 : vector<16x32xi1>, vector<16x32xf32>
    %26 = tpu.concatenate %25, %3 in 1 : vector<16x32xf32>, vector<16x32xf32> -> vector<16x64xf32>
    %c0_13 = arith.constant 0 : index
    %c0_14 = arith.constant 0 : index
    %27 = vector.load %arg5[%c0_13, %c0_14] : memref<64x4xf32, #tpu.memory_space<vmem>>, vector<64x4xf32>
    %cst_15 = arith.constant dense<0.000000e+00> : vector<16x4xf32>
    %28 = tpu.matmul %26, %27, %cst_15 {dimension_numbers = #tpu.dot_dimension_numbers<[1], [0], [0], [1], [0, 0, 1, 1], [], []>} : vector<16x64xf32>, vector<64x4xf32>, vector<16x4xf32> -> vector<16x4xf32>
    %29 = vector.extract_strided_slice %2 {offsets = [2, 0], sizes = [1, 4], strides = [1, 1]} : vector<4x32xf32> to vector<1x4xf32>
    %30 = vector.broadcast %29 : vector<1x4xf32> to vector<16x4xf32>
    %31 = arith.addf %28, %30 : vector<16x4xf32>
    %cst_16 = arith.constant 0.000000e+00 : f32
    %32 = vector.broadcast %cst_16 : f32 to vector<16x60xf32>
    %33 = tpu.concatenate %26, %31, %32 in 1 : vector<16x64xf32>, vector<16x4xf32>, vector<16x60xf32> -> vector<16x128xf32>
    %c0_17 = arith.constant 0 : index
    %c0_18 = arith.constant 0 : index
    %c0_19 = arith.constant 0 : index
    %34 = vector.load %arg7[%c0_17, %c0_18, %c0_19] : memref<1x16x128xf32, #tpu.memory_space<vmem>>, vector<1x16x128xf32>
    %35 = vector.shape_cast %34 : vector<1x16x128xf32> to vector<16x128xf32>
    %36 = vector.shape_cast %33 : vector<16x128xf32> to vector<1x16x128xf32>
    tpu.vector_store %arg7[%c0_17, %c0_18, %c0_19], %36 {strides = array<i32>} : memref<1x16x128xf32, #tpu.memory_space<vmem>>, vector<1x16x128xf32>,
    return
  }
  func.func @transform_0(%arg0: i32) -> (i32, i32, i32) {
    %c0_i32 = arith.constant 0 : i32
    %c0_i32_0 = arith.constant 0 : i32
    %c0_i32_1 = arith.constant 0 : i32
    return %arg0, %c0_i32, %c0_i32_0 : i32, i32, i32
  }
  func.func @transform_1(%arg0: i32) -> (i32, i32) {
    %c0_i32 = arith.constant 0 : i32
    %c0_i32_0 = arith.constant 0 : i32
    %c0_i32_1 = arith.constant 0 : i32
    return %c0_i32, %c0_i32_0 : i32, i32
  }
  func.func @transform_2(%arg0: i32) -> (i32, i32) {
    %c0_i32 = arith.constant 0 : i32
    %c0_i32_0 = arith.constant 0 : i32
    %c0_i32_1 = arith.constant 0 : i32
    return %c0_i32, %c0_i32_0 : i32, i32
  }
  func.func @transform_3(%arg0: i32) -> (i32, i32) {
    %c0_i32 = arith.constant 0 : i32
    %c0_i32_0 = arith.constant 0 : i32
    %c0_i32_1 = arith.constant 0 : i32
    return %c0_i32, %c0_i32_0 : i32, i32
  }
  func.func @transform_4(%arg0: i32) -> (i32, i32) {
    %c0_i32 = arith.constant 0 : i32
    %c0_i32_0 = arith.constant 0 : i32
    %c0_i32_1 = arith.constant 0 : i32
    return %c0_i32, %c0_i32_0 : i32, i32
  }
  func.func @transform_5(%arg0: i32) -> (i32, i32) {
    %c0_i32 = arith.constant 0 : i32
    %c0_i32_0 = arith.constant 0 : i32
    %c0_i32_1 = arith.constant 0 : i32
    return %c0_i32, %c0_i32_0 : i32, i32
  }
  func.func @transform_6(%arg0: i32) -> (i32, i32, i32) {
    %c0_i32 = arith.constant 0 : i32
    %c0_i32_0 = arith.constant 0 : i32
    %c0_i32_1 = arith.constant 0 : i32
    return %arg0, %c0_i32, %c0_i32_0 : i32, i32, i32
  }
}

</mosaic_0001>

<llo_original>
// kernel: spatial_decoder_forward.1
$region0: #{spatial_decoder_forward.1}
  #allocation0 [shape = 'u32[]', space=smem, size = 0x4, offset = 0x4, fixed_abs, tag = 'smem constant byte address 0x4 - core index']
  #allocation1 [shape = 'u32[144,128]{1,0:T(1,128)}', space=vmem, size = 0x12000, scoped, tag = 'internal scratch']
  %s0 = inlined_call_operand.vmem [shape: f32[2,16,40], index: 0, kind: input, shape index: {}]
  %s1 = inlined_call_operand.vmem [shape: f32[32,16], index: 1, kind: input, shape index: {}]
  %s2 = inlined_call_operand.vmem [shape: f32[40,32], index: 2, kind: input, shape index: {}]
  %s3 = inlined_call_operand.vmem [shape: f32[96,32], index: 3, kind: input, shape index: {}]
  %s4 = inlined_call_operand.vmem [shape: f32[64,4], index: 4, kind: input, shape index: {}]
  %s5 = inlined_call_operand.vmem [shape: f32[4,32], index: 5, kind: input, shape index: {}]
  %s6 = inlined_call_operand.vmem [shape: f32[2,16,128], index: 6, kind: output, shape index: {}]
  %s7 = sld [smem:[#allocation0]]
  $region57: #{spatial_decoder_forward.1} parent=0
    _
  %s9 = ssub.s32 1, %s7
  %s10 = scalar_select 0, %s9, %s7
  loop: start=0, step=1, limit=4
  $region2: #{spatial_decoder_forward.1} parent=0 // loop_pre_header
    _
  $region3: #{spatial_decoder_forward.1} parent=0 // loop_header
    %s12 = sphi 0, %s16
    %p13 = scmp.ge.s32.totalorder %s12, 4
    %s22 = sphi 0, %s24
    %s25 = sphi 0, %s22
    %s26 = sphi 0, %s25
    %s42 = sphi 0, %s26
    %s46 = sphi 0, %s46
    %s48 = sphi 0, %s46
    %s49 = sphi 0, %s48
    %s63 = sphi 0, %s49
    %s67 = sphi 0, %s67
    %s69 = sphi 0, %s67
    %s70 = sphi 0, %s69
    %s84 = sphi 0, %s70
    %s88 = sphi 0, %s88
    %s90 = sphi 0, %s88
    %s91 = sphi 0, %s90
    %s105 = sphi 0, %s91
    %s109 = sphi 0, %s109
    %s111 = sphi 0, %s109
    %s112 = sphi 0, %s111
    %s126 = sphi 0, %s112
    %s130 = sphi 0, %s130
    %s132 = sphi 0, %s130
    %s133 = sphi 0, %s132
    %s147 = sphi 0, %s133
    %s153 = sphi 0, %s155
    %s156 = sphi 0, %s153
    %s157 = sphi 0, %s156
    %s173 = sphi 0, %s157
  $region4: #{spatial_decoder_forward.1} parent=0 // loop_header_branch
    %15 = sbr.rel (%p13) target = $region8
  $region5: #{spatial_decoder_forward.1} parent=0 // loop_body
    %s17 = ssub.s32 %s12, 1
    %s18 = ssub.s32 %s12, 2
    %s19 = sadd.s32 %s12, 1
    %s20 = ssub.s32 %s12, %s19
    %p21 = scmp.eq.s32.totalorder %s20, 0
    %s23 = sadd.s32 %s22, 1
    %s24 = scalar_select %p21, %s22, %s23
    %p27 = pneg %p21
    %p28 = scmp.eq.s32.totalorder %s12, 1
    %p29 = por %p27, %p28
    %p30 = scmp.ne.s32.totalorder %s22, %s25
    %p31 = scmp.eq.s32.totalorder %s12, 0
    %p32 = por %p30, %p31
    %p33 = scmp.ne.s32.totalorder %s22, %s25
    %p34 = scmp.eq.s32.totalorder %s17, 1
    %p35 = por %p33, %p34
    %p36 = scmp.ne.s32.totalorder %s25, %s26
    %p37 = scmp.eq.s32.totalorder %s17, 0
    %p38 = por %p36, %p37
    %p39 = scmp.ne.s32.totalorder %s25, %s26
    %p40 = scmp.eq.s32.totalorder %s18, 1
    %p41 = por %p39, %p40
    %p43 = scmp.ne.s32.totalorder %s26, %s42
    %p44 = scmp.eq.s32.totalorder %s18, 0
    %p45 = por %p43, %p44
    %s47 = sadd.s32 %s46, 1
    %p50 = scmp.eq.s32.totalorder %s12, 1
    %p51 = scmp.ne.s32.totalorder %s46, %s48
    %p52 = scmp.eq.s32.totalorder %s12, 0
    %p53 = por %p51, %p52
    %p54 = scmp.ne.s32.totalorder %s46, %s48
    %p55 = scmp.eq.s32.totalorder %s17, 1
    %p56 = por %p54, %p55
    %p57 = scmp.ne.s32.totalorder %s48, %s49
    %p58 = scmp.eq.s32.totalorder %s17, 0
    %p59 = por %p57, %p58
    %p60 = scmp.ne.s32.totalorder %s48, %s49
    %p61 = scmp.eq.s32.totalorder %s18, 1
    %p62 = por %p60, %p61
    %p64 = scmp.ne.s32.totalorder %s49, %s63
    %p65 = scmp.eq.s32.totalorder %s18, 0
    %p66 = por %p64, %p65
    %s68 = sadd.s32 %s67, 1
    %p71 = scmp.eq.s32.totalorder %s12, 1
    %p72 = scmp.ne.s32.totalorder %s67, %s69
    %p73 = scmp.eq.s32.totalorder %s12, 0
    %p74 = por %p72, %p73
    %p75 = scmp.ne.s32.totalorder %s67, %s69
    %p76 = scmp.eq.s32.totalorder %s17, 1
    %p77 = por %p75, %p76
    %p78 = scmp.ne.s32.totalorder %s69, %s70
    %p79 = scmp.eq.s32.totalorder %s17, 0
    %p80 = por %p78, %p79
    %p81 = scmp.ne.s32.totalorder %s69, %s70
    %p82 = scmp.eq.s32.totalorder %s18, 1
    %p83 = por %p81, %p82
    %p85 = scmp.ne.s32.totalorder %s70, %s84
    %p86 = scmp.eq.s32.totalorder %s18, 0
    %p87 = por %p85, %p86
    %s89 = sadd.s32 %s88, 1
    %p92 = scmp.eq.s32.totalorder %s12, 1
    %p93 = scmp.ne.s32.totalorder %s88, %s90
    %p94 = scmp.eq.s32.totalorder %s12, 0
    %p95 = por %p93, %p94
    %p96 = scmp.ne.s32.totalorder %s88, %s90
    %p97 = scmp.eq.s32.totalorder %s17, 1
    %p98 = por %p96, %p97
    %p99 = scmp.ne.s32.totalorder %s90, %s91
    %p100 = scmp.eq.s32.totalorder %s17, 0
    %p101 = por %p99, %p100
    %p102 = scmp.ne.s32.totalorder %s90, %s91
    %p103 = scmp.eq.s32.totalorder %s18, 1
    %p104 = por %p102, %p103
    %p106 = scmp.ne.s32.totalorder %s91, %s105
    %p107 = scmp.eq.s32.totalorder %s18, 0
    %p108 = por %p106, %p107
    %s110 = sadd.s32 %s109, 1
    %p113 = scmp.eq.s32.totalorder %s12, 1
    %p114 = scmp.ne.s32.totalorder %s109, %s111
    %p115 = scmp.eq.s32.totalorder %s12, 0
    %p116 = por %p114, %p115
    %p117 = scmp.ne.s32.totalorder %s109, %s111
    %p118 = scmp.eq.s32.totalorder %s17, 1
    %p119 = por %p117, %p118
    %p120 = scmp.ne.s32.totalorder %s111, %s112
    %p121 = scmp.eq.s32.totalorder %s17, 0
    %p122 = por %p120, %p121
    %p123 = scmp.ne.s32.totalorder %s111, %s112
    %p124 = scmp.eq.s32.totalorder %s18, 1
    %p125 = por %p123, %p124
    %p127 = scmp.ne.s32.totalorder %s112, %s126
    %p128 = scmp.eq.s32.totalorder %s18, 0
    %p129 = por %p127, %p128
    %s131 = sadd.s32 %s130, 1
    %p134 = scmp.eq.s32.totalorder %s12, 1
    %p135 = scmp.ne.s32.totalorder %s130, %s132
    %p136 = scmp.eq.s32.totalorder %s12, 0
    %p137 = por %p135, %p136
    %p138 = scmp.ne.s32.totalorder %s130, %s132
    %p139 = scmp.eq.s32.totalorder %s17, 1
    %p140 = por %p138, %p139
    %p141 = scmp.ne.s32.totalorder %s132, %s133
    %p142 = scmp.eq.s32.totalorder %s17, 0
    %p143 = por %p141, %p142
    %p144 = scmp.ne.s32.totalorder %s132, %s133
    %p145 = scmp.eq.s32.totalorder %s18, 1
    %p146 = por %p144, %p145
    %p148 = scmp.ne.s32.totalorder %s133, %s147
    %p149 = scmp.eq.s32.totalorder %s18, 0
    %p150 = por %p148, %p149
    %s151 = ssub.s32 %s12, %s19
    %p152 = scmp.eq.s32.totalorder %s151, 0
    %s154 = sadd.s32 %s153, 1
    %s155 = scalar_select %p152, %s153, %s154
    %p158 = pneg %p152
    %p159 = scmp.eq.s32.totalorder %s12, 1
    %p160 = por %p158, %p159
    %p161 = scmp.ne.s32.totalorder %s153, %s156
    %p162 = scmp.eq.s32.totalorder %s12, 0
    %p163 = por %p161, %p162
    %p164 = scmp.ne.s32.totalorder %s153, %s156
    %p165 = scmp.eq.s32.totalorder %s17, 1
    %p166 = por %p164, %p165
    %p167 = scmp.ne.s32.totalorder %s156, %s157
    %p168 = scmp.eq.s32.totalorder %s17, 0
    %p169 = por %p167, %p168
    %p170 = scmp.ne.s32.totalorder %s156, %s157
    %p171 = scmp.eq.s32.totalorder %s18, 1
    %p172 = por %p170, %p171
    %p174 = scmp.ne.s32.totalorder %s157, %s173
    %p175 = scmp.eq.s32.totalorder %s18, 0
    %p176 = por %p174, %p175
    %p177 = scmp.le.s32.totalorder 1, %s12
    %p178 = scmp.lt.s32.totalorder %s12, 3
    %p179 = pnand %p177, %p178
    %p180 = pneg %p179
    // Predicated region
    $region9: #{spatial_decoder_forward.1} parent=5 // pred_check
      _
    $region10: #{spatial_decoder_forward.1} parent=5 // pred_check_branch
      %182 = sbr.rel (%p179) target = $region12
    $region11: #{spatial_decoder_forward.1} parent=5 // pred_region
      %s183 = ssub.s32 %s12, 1
      // Predicated region
      $region13: #{spatial_decoder_forward.1} parent=11 // pred_check
        %p184 = pneg %p59
      $region14: #{spatial_decoder_forward.1} parent=11 // pred_check_branch
        %186 = sbr.rel (%p184) target = $region16
      $region15: #{spatial_decoder_forward.1} parent=11 // pred_region
        _
      $region16: #{spatial_decoder_forward.1} parent=11 // pred_fallthru
        _
      // Predicated region
      $region17: #{spatial_decoder_forward.1} parent=11 // pred_check
        %p187 = pneg %p80
      $region18: #{spatial_decoder_forward.1} parent=11 // pred_check_branch
        %189 = sbr.rel (%p187) target = $region20
      $region19: #{spatial_decoder_forward.1} parent=11 // pred_region
        _
      $region20: #{spatial_decoder_forward.1} parent=11 // pred_fallthru
        _
      // Predicated region
      $region21: #{spatial_decoder_forward.1} parent=11 // pred_check
        %p190 = pneg %p101
      $region22: #{spatial_decoder_forward.1} parent=11 // pred_check_branch
        %192 = sbr.rel (%p190) target = $region24
      $region23: #{spatial_decoder_forward.1} parent=11 // pred_region
        _
      $region24: #{spatial_decoder_forward.1} parent=11 // pred_fallthru
        _
      // Predicated region
      $region25: #{spatial_decoder_forward.1} parent=11 // pred_check
        %p193 = pneg %p122
      $region26: #{spatial_decoder_forward.1} parent=11 // pred_check_branch
        %195 = sbr.rel (%p193) target = $region28
      $region27: #{spatial_decoder_forward.1} parent=11 // pred_region
        _
      $region28: #{spatial_decoder_forward.1} parent=11 // pred_fallthru
        _
      // Predicated region
      $region29: #{spatial_decoder_forward.1} parent=11 // pred_check
        %p196 = pneg %p143
      $region30: #{spatial_decoder_forward.1} parent=11 // pred_check_branch
        %198 = sbr.rel (%p196) target = $region32
      $region31: #{spatial_decoder_forward.1} parent=11 // pred_region
        _
      $region32: #{spatial_decoder_forward.1} parent=11 // pred_fallthru
        _
    $region12: #{spatial_decoder_forward.1} parent=5 // pred_fallthru
      _
    %p199 = scmp.lt.s32.totalorder %s12, 2
    // Predicated region
    $region33: #{spatial_decoder_forward.1} parent=5 // pred_check
      %p200 = pneg %p199
    $region34: #{spatial_decoder_forward.1} parent=5 // pred_check_branch
      %202 = sbr.rel (%p200) target = $region36
    $region35: #{spatial_decoder_forward.1} parent=5 // pred_region
      // Predicated region
      $region37: #{spatial_decoder_forward.1} parent=35 // pred_check
        %p203 = pneg %p32
      $region38: #{spatial_decoder_forward.1} parent=35 // pred_check_branch
        %205 = sbr.rel (%p203) target = $region40
      $region39: #{spatial_decoder_forward.1} parent=35 // pred_region
        %p206 = scmp.lt.s32.totalorder %s12, 1
        %s207 = scalar_select %p206, %s12, 1
        %s208 = smul.addr %s207, 2
        %s209 = smul.addr %s208, 8
        %s210 = scalar_lea.vmem %s0, %s209
      $region40: #{spatial_decoder_forward.1} parent=35 // pred_fallthru
        _
    $region36: #{spatial_decoder_forward.1} parent=5 // pred_fallthru
      _
    %p211 = scmp.le.s32.totalorder 1, %s12
    %p212 = scmp.lt.s32.totalorder %s12, 3
    %p213 = pnand %p211, %p212
    %p214 = pneg %p213
    // Predicated region
    $region41: #{spatial_decoder_forward.1} parent=5 // pred_check
      _
    $region42: #{spatial_decoder_forward.1} parent=5 // pred_check_branch
      %216 = sbr.rel (%p213) target = $region44
    $region43: #{spatial_decoder_forward.1} parent=5 // pred_region
      %s217 = ssub.s32 %s12, 1
      %p218 = scmp.lt.s32.totalorder %s17, 1
      %s219 = scalar_select %p218, %s17, 1
      %s220 = smul.addr %s219, 2
      %s221 = smul.addr %s220, 8
      %s222 = scalar_lea.vmem %s0, %s221
      %p223 = pneg %p38
      %p224 = pneg %p35
      %p225 = pneg %p59
      %p226 = pneg %p56
      %p227 = pneg %p80
      %p228 = pneg %p77
      %p229 = pneg %p101
      %p230 = pneg %p98
      %p231 = pneg %p122
      %p232 = pneg %p119
      %p233 = pneg %p143
      %p234 = pneg %p140
      %p235 = pneg %p169
      %p236 = pneg %p166
      %p237 = scmp.lt.s32.totalorder %s17, 1
      %s238 = scalar_select %p237, %s17, 1
      %s239 = smul.addr %s238, 2
      %s240 = smul.addr %s239, 8
      %s241 = scalar_lea.vmem %s6, %s240
      %p242 = scmp.lt.s32.totalorder %s17, 1
      %s243 = scalar_select %p242, %s17, 1
      %s244 = smul.addr %s243, 2
      %s245 = smul.addr %s244, 8
      %s246 = scalar_lea.vmem %s0, %s245
      %p247 = scmp.lt.s32.totalorder %s17, 1
      %s248 = scalar_select %p247, %s17, 1
      %s249 = smul.addr %s248, 2
      %s250 = smul.addr %s249, 8
      %s251 = scalar_lea.vmem %s6, %s250
      %v252 = vld [vmem:[%s246] sm:$0xff]
      %v253 = vld [vmem:[%s246 + $0x8] sm:$0xff]
      %v254 = vld [vmem:[%s5] sm:$0xf]
      %v255 = vld [vmem:[%s2] sm:$0xff]
      %v256 = vld [vmem:[%s2 + $0x8] sm:$0xff]
      %v257 = vld [vmem:[%s2 + $0x10] sm:$0xff]
      %v258 = vld [vmem:[%s2 + $0x18] sm:$0xff]
      %v259 = vld [vmem:[%s2 + $0x20] sm:$0xff]
      %v260 = vlaneseq
      %v261 = vshrl.u32 %v260, 7
      %v262 = vsub.s32 0, %v261
      %v263 = vrot.slane %v254, %v262
      %vm264 = vcmask 326656
      %v266 = vsel %vm264, %v252, 0
      %v269 = vsel %vm264, %v253, 0
      %271 = vmatprep.subr.mxu0 0.0
      %272 = vmatpush1.msra.mxu0 %v255
      %273 = vmatprep.subr.mxu0 0.0
      %274 = vmatpush1.msra.mxu0 %v256
      %275 = vmatprep.subr.mxu0 0.0
      %276 = vmatpush1.msra.mxu0 %v257
      %277 = vmatprep.subr.mxu0 0.0
      %278 = vmatpush1.msra.mxu0 %v258
      %279 = vmatprep.subr.mxu0 0.0
      %280 = vmatpush1.msra.mxu0 %v259
      %281 = vmatprep.subr.mxu0 0.0
      %282 = vmatpush1.msra.mxu0 0.0
      %283 = vmatprep.subr.mxu0 0.0
      %284 = vmatpush1.msra.mxu0 0.0
      %285 = vmatprep.subr.mxu0 0.0
      %286 = vmatpush1.msra.mxu0 0.0
      %287 = vmatprep.subr.mxu0 0.0
      %288 = vmatpush1.msra.mxu0 0.0
      %289 = vmatprep.subr.mxu0 0.0
      %290 = vmatpush1.msra.mxu0 0.0
      %291 = vmatprep.subr.mxu0 0.0
      %292 = vmatpush1.msra.mxu0 0.0
      %293 = vmatprep.subr.mxu0 0.0
      %294 = vmatpush1.msra.mxu0 0.0
      %295 = vmatprep.subr.mxu0 0.0
      %296 = vmatpush1.msra.mxu0 0.0
      %297 = vmatprep.subr.mxu0 0.0
      %298 = vmatpush1.msra.mxu0 0.0
      %299 = vmatprep.subr.mxu0 0.0
      %300 = vmatpush1.msra.mxu0 0.0
      %301 = vmatprep.subr.mxu0 0.0
      %302 = vmatpush1.msra.mxu0 0.0
      %303 = vmatprep.subr.mxu0 0.0
      %304 = vmatpush1.msra.mxu0 0.0
      %305 = vmatprep.subr.mxu0 0.0
      %306 = vmatpush1.msra.mxu0 0.0
      %307 = vmatprep.subr.mxu0 0.0
      %308 = vmatpush1.msra.mxu0 0.0
      %309 = vmatprep.subr.mxu0 0.0
      %310 = vmatpush1.msra.mxu0 0.0
      %311 = vmatprep.subr.mxu0 0.0
      %312 = vmatpush1.msra.mxu0 0.0
      %313 = vmatprep.subr.mxu0 0.0
      %314 = vmatpush1.msra.mxu0 0.0
      %315 = vmatprep.subr.mxu0 0.0
      %316 = vmatpush1.msra.mxu0 0.0
      %317 = vmatprep.subr.mxu0 0.0
      %318 = vmatpush1.msra.mxu0 0.0
      %319 = vmatprep.subr.mxu0 0.0
      %320 = vmatpush1.msra.mxu0 0.0
      %321 = vmatprep.subr.mxu0 0.0
      %322 = vmatpush1.msra.mxu0 0.0
      %323 = vmatprep.subr.mxu0 0.0
      %324 = vmatpush1.msra.mxu0 0.0
      %325 = vmatprep.subr.mxu0 0.0
      %326 = vmatpush1.msra.mxu0 0.0
      %327 = vmatprep.subr.mxu0 0.0
      %328 = vmatpush1.msra.mxu0 0.0
      %329 = vmatprep.subr.mxu0 0.0
      %330 = vmatpush1.msra.mxu0 0.0
      %331 = vmatprep.subr.mxu0 0.0
      %332 = vmatpush1.msra.mxu0 0.0
      %333 = vmatprep.subr.mxu0 0.0
      %334 = vmatpush1.msra.mxu0 0.0
      %335 = vmatprep.mubr.f32.mxu0 0.0
      %336 = vmatmul.mubr.f32.gmra.mrb[0].mxu0 %v266
      %v337 = vpop.f32.mrb[0].mxu0
      %v338 = vadd.f32 %v263, %v337
      %v339 = vpop.f32.mrb[0].mxu0
      %340 = vmatprep.mubr.f32.mxu0 0.0
      %341 = vmatmul.mubr.f32.gmra.mrb[0].mxu0 %v269
      %v342 = vpop.f32.mrb[0].mxu0
      %v343 = vadd.f32 %v263, %v342
      %v344 = vpop.f32.mrb[0].mxu0
      %345 = vdwg.mxu0
      %v346 = vld [vmem:[%s1] sm:$0xff]
      %v347 = vld [vmem:[%s1 + $0x8] sm:$0xff]
      %v348 = vld [vmem:[%s1 + $0x10] sm:$0xff]
      %v349 = vld [vmem:[%s1 + $0x18] sm:$0xff]
      %vm350 = vcmask 130048
      %v352 = vsel %vm350, %v346, 0
      %v355 = vsel %vm350, %v347, 0
      %v358 = vsel %vm350, %v348, 0
      %v361 = vsel %vm350, %v349, 0
      %363 = vmatprep.subr.mxu0 0.0
      %364 = vmatpush1.msra.mxu0 %v338
      %365 = vmatprep.subr.mxu0 0.0
      %366 = vmatpush1.msra.mxu0 %v343
      %367 = vmatprep.subr.mxu0 0.0
      %368 = vmatpush1.msra.mxu0 0.0
      %369 = vmatprep.subr.mxu0 0.0
      %370 = vmatpush1.msra.mxu0 0.0
      %371 = vmatprep.subr.mxu0 0.0
      %372 = vmatpush1.msra.mxu0 0.0
      %373 = vmatprep.subr.mxu0 0.0
      %374 = vmatpush1.msra.mxu0 0.0
      %375 = vmatprep.subr.mxu0 0.0
      %376 = vmatpush1.msra.mxu0 0.0
      %377 = vmatprep.subr.mxu0 0.0
      %378 = vmatpush1.msra.mxu0 0.0
      %379 = vmatprep.subr.mxu0 0.0
      %380 = vmatpush1.msra.mxu0 0.0
      %381 = vmatprep.subr.mxu0 0.0
      %382 = vmatpush1.msra.mxu0 0.0
      %383 = vmatprep.subr.mxu0 0.0
      %384 = vmatpush1.msra.mxu0 0.0
      %385 = vmatprep.subr.mxu0 0.0
      %386 = vmatpush1.msra.mxu0 0.0
      %387 = vmatprep.subr.mxu0 0.0
      %388 = vmatpush1.msra.mxu0 0.0
      %389 = vmatprep.subr.mxu0 0.0
      %390 = vmatpush1.msra.mxu0 0.0
      %391 = vmatprep.subr.mxu0 0.0
      %392 = vmatpush1.msra.mxu0 0.0
      %393 = vmatprep.subr.mxu0 0.0
      %394 = vmatpush1.msra.mxu0 0.0
      %395 = vmatprep.subr.mxu0 0.0
      %396 = vmatpush1.msra.mxu0 0.0
      %397 = vmatprep.subr.mxu0 0.0
      %398 = vmatpush1.msra.mxu0 0.0
      %399 = vmatprep.subr.mxu0 0.0
      %400 = vmatpush1.msra.mxu0 0.0
      %401 = vmatprep.subr.mxu0 0.0
      %402 = vmatpush1.msra.mxu0 0.0
      %403 = vmatprep.subr.mxu0 0.0
      %404 = vmatpush1.msra.mxu0 0.0
      %405 = vmatprep.subr.mxu0 0.0
      %406 = vmatpush1.msra.mxu0 0.0
      %407 = vmatprep.subr.mxu0 0.0
      %408 = vmatpush1.msra.mxu0 0.0
      %409 = vmatprep.subr.mxu0 0.0
      %410 = vmatpush1.msra.mxu0 0.0
      %411 = vmatprep.subr.mxu0 0.0
      %412 = vmatpush1.msra.mxu0 0.0
      %413 = vmatprep.subr.mxu0 0.0
      %414 = vmatpush1.msra.mxu0 0.0
      %415 = vmatprep.subr.mxu0 0.0
      %416 = vmatpush1.msra.mxu0 0.0
      %417 = vmatprep.subr.mxu0 0.0
      %418 = vmatpush1.msra.mxu0 0.0
      %419 = vmatprep.subr.mxu0 0.0
      %420 = vmatpush1.msra.mxu0 0.0
      %421 = vmatprep.subr.mxu0 0.0
      %422 = vmatpush1.msra.mxu0 0.0
      %423 = vmatprep.subr.mxu0 0.0
      %424 = vmatpush1.msra.mxu0 0.0
      %425 = vmatprep.subr.mxu0 0.0
      %426 = vmatpush1.msra.mxu0 0.0
      %427 = vmatprep.mubr.f32.mxu0 0.0
      %428 = vmatmul.mubr.f32.gmra.mrb[0].mxu0 %v352
      %v429 = vpop.f32.mrb[0].mxu0
      %v430 = vadd.f32 0.0, %v429
      %v431 = vpop.f32.mrb[0].mxu0
      %432 = vmatprep.mubr.f32.mxu0 0.0
      %433 = vmatmul.mubr.f32.gmra.mrb[0].mxu0 %v355
      %v434 = vpop.f32.mrb[0].mxu0
      %v435 = vadd.f32 0.0, %v434
      %v436 = vpop.f32.mrb[0].mxu0
      %437 = vmatprep.mubr.f32.mxu0 0.0
      %438 = vmatmul.mubr.f32.gmra.mrb[0].mxu0 %v358
      %v439 = vpop.f32.mrb[0].mxu0
      %v440 = vadd.f32 0.0, %v439
      %v441 = vpop.f32.mrb[0].mxu0
      %442 = vmatprep.mubr.f32.mxu0 0.0
      %443 = vmatmul.mubr.f32.gmra.mrb[0].mxu0 %v361
      %v444 = vpop.f32.mrb[0].mxu0
      %v445 = vadd.f32 0.0, %v444
      %v446 = vpop.f32.mrb[0].mxu0
      %447 = vdwg.mxu0
      %450 = vrot.lane.b32.xlu0 %v440, 32
      %v451 = vpop.permute.xlu0 %450
      %452 = vrot.lane.b32.xlu0 %v445, 32
      %v453 = vpop.permute.xlu0 %452
      %vm456 = vcmask 261120
      %v457 = vsel %vm456, %v430, %v451
      %v458 = vsel %vm456, %v435, %v453
      %459 = vrot.lane.b32.xlu0 %v252, 64
      %v460 = vpop.permute.xlu0 %459
      %461 = vrot.lane.b32.xlu0 %v253, 64
      %v462 = vpop.permute.xlu0 %461
      %vm465 = vcmask 523264
      %v466 = vsel %vm465, %v457, %v460
      %v467 = vsel %vm465, %v458, %v462
      %v468 = vld [vmem:[%s3] sm:$0xff]
      %v469 = vld [vmem:[%s3 + $0x8] sm:$0xff]
      %v470 = vld [vmem:[%s3 + $0x10] sm:$0xff]
      %v471 = vld [vmem:[%s3 + $0x18] sm:$0xff]
      %v472 = vld [vmem:[%s3 + $0x20] sm:$0xff]
      %v473 = vld [vmem:[%s3 + $0x28] sm:$0xff]
      %v474 = vld [vmem:[%s3 + $0x30] sm:$0xff]
      %v475 = vld [vmem:[%s3 + $0x38] sm:$0xff]
      %v476 = vld [vmem:[%s3 + $0x40] sm:$0xff]
      %v477 = vld [vmem:[%s3 + $0x48] sm:$0xff]
      %v478 = vld [vmem:[%s3 + $0x50] sm:$0xff]
      %v479 = vld [vmem:[%s3 + $0x58] sm:$0xff]
      %v480 = vlaneseq
      %v481 = vshrl.u32 %v480, 7
      %v482 = vsub.s32 1, %v481
      %v483 = vrot.slane %v254, %v482
      %vm484 = vcmask 785408
      %v486 = vsel %vm484, %v466, 0
      %v489 = vsel %vm484, %v467, 0
      %491 = vmatprep.subr.mxu0 0.0
      %492 = vmatpush1.msra.mxu0 %v468
      %493 = vmatprep.subr.mxu0 0.0
      %494 = vmatpush1.msra.mxu0 %v469
      %495 = vmatprep.subr.mxu0 0.0
      %496 = vmatpush1.msra.mxu0 %v470
      %497 = vmatprep.subr.mxu0 0.0
      %498 = vmatpush1.msra.mxu0 %v471
      %499 = vmatprep.subr.mxu0 0.0
      %500 = vmatpush1.msra.mxu0 %v472
      %501 = vmatprep.subr.mxu0 0.0
      %502 = vmatpush1.msra.mxu0 %v473
      %503 = vmatprep.subr.mxu0 0.0
      %504 = vmatpush1.msra.mxu0 %v474
      %505 = vmatprep.subr.mxu0 0.0
      %506 = vmatpush1.msra.mxu0 %v475
      %507 = vmatprep.subr.mxu0 0.0
      %508 = vmatpush1.msra.mxu0 %v476
      %509 = vmatprep.subr.mxu0 0.0
      %510 = vmatpush1.msra.mxu0 %v477
      %511 = vmatprep.subr.mxu0 0.0
      %512 = vmatpush1.msra.mxu0 %v478
      %513 = vmatprep.subr.mxu0 0.0
      %514 = vmatpush1.msra.mxu0 %v479
      %515 = vmatprep.subr.mxu0 0.0
      %516 = vmatpush1.msra.mxu0 0.0
      %517 = vmatprep.subr.mxu0 0.0
      %518 = vmatpush1.msra.mxu0 0.0
      %519 = vmatprep.subr.mxu0 0.0
      %520 = vmatpush1.msra.mxu0 0.0
      %521 = vmatprep.subr.mxu0 0.0
      %522 = vmatpush1.msra.mxu0 0.0
      %523 = vmatprep.subr.mxu0 0.0
      %524 = vmatpush1.msra.mxu0 0.0
      %525 = vmatprep.subr.mxu0 0.0
      %526 = vmatpush1.msra.mxu0 0.0
      %527 = vmatprep.subr.mxu0 0.0
      %528 = vmatpush1.msra.mxu0 0.0
      %529 = vmatprep.subr.mxu0 0.0
      %530 = vmatpush1.msra.mxu0 0.0
      %531 = vmatprep.subr.mxu0 0.0
      %532 = vmatpush1.msra.mxu0 0.0
      %533 = vmatprep.subr.mxu0 0.0
      %534 = vmatpush1.msra.mxu0 0.0
      %535 = vmatprep.subr.mxu0 0.0
      %536 = vmatpush1.msra.mxu0 0.0
      %537 = vmatprep.subr.mxu0 0.0
      %538 = vmatpush1.msra.mxu0 0.0
      %539 = vmatprep.subr.mxu0 0.0
      %540 = vmatpush1.msra.mxu0 0.0
      %541 = vmatprep.subr.mxu0 0.0
      %542 = vmatpush1.msra.mxu0 0.0
      %543 = vmatprep.subr.mxu0 0.0
      %544 = vmatpush1.msra.mxu0 0.0
      %545 = vmatprep.subr.mxu0 0.0
      %546 = vmatpush1.msra.mxu0 0.0
      %547 = vmatprep.subr.mxu0 0.0
      %548 = vmatpush1.msra.mxu0 0.0
      %549 = vmatprep.subr.mxu0 0.0
      %550 = vmatpush1.msra.mxu0 0.0
      %551 = vmatprep.subr.mxu0 0.0
      %552 = vmatpush1.msra.mxu0 0.0
      %553 = vmatprep.subr.mxu0 0.0
      %554 = vmatpush1.msra.mxu0 0.0
      %555 = vmatprep.mubr.f32.mxu0 0.0
      %556 = vmatmul.mubr.f32.gmra.mrb[0].mxu0 %v486
      %v557 = vpop.f32.mrb[0].mxu0
      %v558 = vadd.f32 %v483, %v557
      %v559 = vpop.f32.mrb[0].mxu0
      %560 = vmatprep.mubr.f32.mxu0 0.0
      %561 = vmatmul.mubr.f32.gmra.mrb[0].mxu0 %v489
      %v562 = vpop.f32.mrb[0].mxu0
      %v563 = vadd.f32 %v483, %v562
      %v564 = vpop.f32.mrb[0].mxu0
      %565 = vdwg.mxu0
      %vm566 = vcmp.ge.f32.partialorder %v558, 0.0
      %vm567 = vcmp.ge.f32.partialorder %v563, 0.0
      %v569 = vrot.slane %v254, 3
      %s570 = vtos %v569
      %v571 = vstv %s570
      %v573 = vmul.f32 %v571, %v558
      %v574 = vmul.f32 %v571, %v563
      %v575 = vsel %vm566, %v558, %v573
      %v576 = vsel %vm567, %v563, %v574
      %577 = vrot.lane.b32.xlu0 %v252, 32
      %v578 = vpop.permute.xlu0 %577
      %579 = vrot.lane.b32.xlu0 %v253, 32
      %v580 = vpop.permute.xlu0 %579
      %v583 = vsel %vm456, %v575, %v578
      %v584 = vsel %vm456, %v576, %v580
      %v585 = vld [vmem:[%s4] sm:$0xff]
      %v586 = vld [vmem:[%s4 + $0x8] sm:$0xff]
      %v587 = vld [vmem:[%s4 + $0x10] sm:$0xff]
      %v588 = vld [vmem:[%s4 + $0x18] sm:$0xff]
      %v589 = vld [vmem:[%s4 + $0x20] sm:$0xff]
      %v590 = vld [vmem:[%s4 + $0x28] sm:$0xff]
      %v591 = vld [vmem:[%s4 + $0x30] sm:$0xff]
      %v592 = vld [vmem:[%s4 + $0x38] sm:$0xff]
      %v593 = vlaneseq
      %v594 = vshrl.u32 %v593, 7
      %v595 = vsub.s32 2, %v594
      %v596 = vrot.slane %v254, %v595
      %v598 = vsel %vm465, %v583, 0
      %v601 = vsel %vm465, %v584, 0
      %603 = vmatprep.subr.mxu0 0.0
      %604 = vmatpush1.msra.mxu0 %v585
      %605 = vmatprep.subr.mxu0 0.0
      %606 = vmatpush1.msra.mxu0 %v586
      %607 = vmatprep.subr.mxu0 0.0
      %608 = vmatpush1.msra.mxu0 %v587
      %609 = vmatprep.subr.mxu0 0.0
      %610 = vmatpush1.msra.mxu0 %v588
      %611 = vmatprep.subr.mxu0 0.0
      %612 = vmatpush1.msra.mxu0 %v589
      %613 = vmatprep.subr.mxu0 0.0
      %614 = vmatpush1.msra.mxu0 %v590
      %615 = vmatprep.subr.mxu0 0.0
      %616 = vmatpush1.msra.mxu0 %v591
      %617 = vmatprep.subr.mxu0 0.0
      %618 = vmatpush1.msra.mxu0 %v592
      %619 = vmatprep.subr.mxu0 0.0
      %620 = vmatpush1.msra.mxu0 0.0
      %621 = vmatprep.subr.mxu0 0.0
      %622 = vmatpush1.msra.mxu0 0.0
      %623 = vmatprep.subr.mxu0 0.0
      %624 = vmatpush1.msra.mxu0 0.0
      %625 = vmatprep.subr.mxu0 0.0
      %626 = vmatpush1.msra.mxu0 0.0
      %627 = vmatprep.subr.mxu0 0.0
      %628 = vmatpush1.msra.mxu0 0.0
      %629 = vmatprep.subr.mxu0 0.0
      %630 = vmatpush1.msra.mxu0 0.0
      %631 = vmatprep.subr.mxu0 0.0
      %632 = vmatpush1.msra.mxu0 0.0
      %633 = vmatprep.subr.mxu0 0.0
      %634 = vmatpush1.msra.mxu0 0.0
      %635 = vmatprep.subr.mxu0 0.0
      %636 = vmatpush1.msra.mxu0 0.0
      %637 = vmatprep.subr.mxu0 0.0
      %638 = vmatpush1.msra.mxu0 0.0
      %639 = vmatprep.subr.mxu0 0.0
      %640 = vmatpush1.msra.mxu0 0.0
      %641 = vmatprep.subr.mxu0 0.0
      %642 = vmatpush1.msra.mxu0 0.0
      %643 = vmatprep.subr.mxu0 0.0
      %644 = vmatpush1.msra.mxu0 0.0
      %645 = vmatprep.subr.mxu0 0.0
      %646 = vmatpush1.msra.mxu0 0.0
      %647 = vmatprep.subr.mxu0 0.0
      %648 = vmatpush1.msra.mxu0 0.0
      %649 = vmatprep.subr.mxu0 0.0
      %650 = vmatpush1.msra.mxu0 0.0
      %651 = vmatprep.subr.mxu0 0.0
      %652 = vmatpush1.msra.mxu0 0.0
      %653 = vmatprep.subr.mxu0 0.0
      %654 = vmatpush1.msra.mxu0 0.0
      %655 = vmatprep.subr.mxu0 0.0
      %656 = vmatpush1.msra.mxu0 0.0
      %657 = vmatprep.subr.mxu0 0.0
      %658 = vmatpush1.msra.mxu0 0.0
      %659 = vmatprep.subr.mxu0 0.0
      %660 = vmatpush1.msra.mxu0 0.0
      %661 = vmatprep.subr.mxu0 0.0
      %662 = vmatpush1.msra.mxu0 0.0
      %663 = vmatprep.subr.mxu0 0.0
      %664 = vmatpush1.msra.mxu0 0.0
      %665 = vmatprep.subr.mxu0 0.0
      %666 = vmatpush1.msra.mxu0 0.0
      %667 = vmatprep.mubr.f32.mxu0 0.0
      %668 = vmatmul.mubr.f32.gmra.mrb[0].mxu0 %v598
      %v669 = vpop.f32.mrb[0].mxu0
      %v670 = vadd.f32 %v596, %v669
      %v671 = vpop.f32.mrb[0].mxu0
      %672 = vmatprep.mubr.f32.mxu0 0.0
      %673 = vmatmul.mubr.f32.gmra.mrb[0].mxu0 %v601
      %v674 = vpop.f32.mrb[0].mxu0
      %v675 = vadd.f32 %v596, %v674
      %v676 = vpop.f32.mrb[0].mxu0
      %677 = vdwg.mxu0
      %680 = vrot.lane.b32.xlu0 %v670, 64
      %v681 = vpop.permute.xlu0 %680
      %682 = vrot.lane.b32.xlu0 %v675, 64
      %v683 = vpop.permute.xlu0 %682
      %v686 = vsel %vm465, %v583, %v681
      %v687 = vsel %vm465, %v584, %v683
      %vm688 = vcmask 556032
      %v689 = vsel %vm688, %v686, 0.0
      %v690 = vsel %vm688, %v687, 0.0
      %691 = vst [vmem:[%s251] sm:$0xff] %v689
      %692 = vst [vmem:[%s251 + $0x8] sm:$0xff] %v690
      %p693 = scmp.lt.s32.totalorder %s17, 1
      %s694 = scalar_select %p693, %s17, 1
      %s695 = smul.addr %s694, 2
      %s696 = smul.addr %s695, 8
      %s697 = scalar_lea.vmem %s6, %s696
      // Predicated region
      $region45: #{spatial_decoder_forward.1} parent=43 // pred_check
        %p698 = pneg %p166
      $region46: #{spatial_decoder_forward.1} parent=43 // pred_check_branch
        %700 = sbr.rel (%p698) target = $region48
      $region47: #{spatial_decoder_forward.1} parent=43 // pred_region
        _
      $region48: #{spatial_decoder_forward.1} parent=43 // pred_fallthru
        _
    $region44: #{spatial_decoder_forward.1} parent=5 // pred_fallthru
      _
    %p701 = scmp.le.s32.totalorder 2, %s12
    // Predicated region
    $region49: #{spatial_decoder_forward.1} parent=5 // pred_check
      %p702 = pneg %p701
    $region50: #{spatial_decoder_forward.1} parent=5 // pred_check_branch
      %704 = sbr.rel (%p702) target = $region52
    $region51: #{spatial_decoder_forward.1} parent=5 // pred_region
      %s705 = ssub.s32 %s12, 2
      // Predicated region
      $region53: #{spatial_decoder_forward.1} parent=51 // pred_check
        %p706 = pneg %p172
      $region54: #{spatial_decoder_forward.1} parent=51 // pred_check_branch
        %708 = sbr.rel (%p706) target = $region56
      $region55: #{spatial_decoder_forward.1} parent=51 // pred_region
        %p709 = scmp.lt.s32.totalorder %s18, 1
        %s710 = scalar_select %p709, %s18, 1
        %s711 = smul.addr %s710, 2
        %s712 = smul.addr %s711, 8
        %s713 = scalar_lea.vmem %s6, %s712
      $region56: #{spatial_decoder_forward.1} parent=51 // pred_fallthru
        _
    $region52: #{spatial_decoder_forward.1} parent=5 // pred_fallthru
      _
  $region6: #{spatial_decoder_forward.1} parent=0 // loop_footer
    %s16 = sadd.s32 1, %s12
  $region7: #{spatial_decoder_forward.1} parent=0 // loop_footer_branch
    %11 = sbr.rel target = $region3
  $region8: #{spatial_decoder_forward.1} parent=0 // loop_exit
    _

</llo_original>
